<compile_context>
chip_gen: v7x
topology: tpu7x:2x2x1
jax: 0.10.0
libtpu: 0.0.40
codegen_flags: <defaults>
</compile_context>

<pallas_src>
import jax
import jax.numpy as jnp
from jax.experimental import pallas as pl
from jax.experimental.pallas import tpu as pltpu

MAX_BATCH_TILE = 2048   # ~3 MiB peak VMEM at f32 -> safe on v5e/v6e/v7x defaults


def _round_up(n, m):
    return ((n + m - 1) // m) * m


def dqn_kernel(x_ref, w1_ref, b1_ref, w2_ref, b2_ref, w3_ref, b3_ref, o_ref):
    cdt = w1_ref.dtype  # compute dtype (f32 or bf16); accumulation is always f32
    x = x_ref[...].astype(cdt)  # in-kernel cast: no extra HBM pass over x
    # Layer 1: Linear + ReLU (MXU matmul, f32 accumulation)
    h1 = jnp.dot(x, w1_ref[...], preferred_element_type=jnp.float32)
    h1 = jnp.maximum(h1 + b1_ref[...], 0.0)
    # Layer 2: Linear + ReLU
    h2 = jnp.dot(h1.astype(cdt), w2_ref[...], preferred_element_type=jnp.float32)
    h2 = jnp.maximum(h2 + b2_ref[...], 0.0)
    # Layer 3: Linear (narrow n_actions output; masked vst, but 32x fewer bytes)
    out = jnp.dot(h2.astype(cdt), w3_ref[...], preferred_element_type=jnp.float32)
    o_ref[...] = (out + b3_ref[...]).astype(o_ref.dtype)


def prepare_params(params, compute_dtype=jnp.float32):
    """Cast weights ONCE outside the hot path. Biases stay f32 (added on f32 acc)."""
    cdt = jnp.dtype(compute_dtype)
    return {
        "w1": params["w1"].astype(cdt), "b1": params["b1"].astype(jnp.float32),
        "w2": params["w2"].astype(cdt), "b2": params["b2"].astype(jnp.float32),
        "w3": params["w3"].astype(cdt), "b3": params["b3"].astype(jnp.float32),
    }


@jax.jit
def dqn_forward(x, params):
    """Fused DQN forward pass.

    x: (B, n_states)  (any float dtype; cast to weight dtype inside the kernel)
    params: w1 (n_states,128), b1 (1,128), w2 (128,128), b2 (1,128),
            w3 (128,n_actions), b3 (1,n_actions)
    returns: (B, n_actions) float32
    """
    w1, b1 = params["w1"], params["b1"].astype(jnp.float32)
    w2, b2 = params["w2"], params["b2"].astype(jnp.float32)
    w3, b3 = params["w3"], params["b3"].astype(jnp.float32)

    B, n_states = x.shape
    hidden = w1.shape[1]
    n_actions = w3.shape[1]

    # --- batch tile: ceil(B/2) so large batches always give >=2 grid steps
    #     (engages both TCs on v7x); rounded to 16 (bf16 sublane pack) or to the
    #     256 MXU granule once large; capped at MAX_BATCH_TILE. ---
    half = -(-B // 2)
    mult = 256 if half >= 256 else 16
    bt = min(MAX_BATCH_TILE, _round_up(half, mult))

    # Only pad x when B is smaller than a single tile (tiny action-selection
    # batches); for large B the ragged last block is handled by Pallas masking,
    # so there is no extra HBM pass over x or out.
    b_total = B
    if B < bt:
        b_total = bt
        x = jnp.pad(x, ((0, bt - B), (0, 0)))

    grid = (pl.cdiv(b_total, bt),)

    in_specs = [
        pl.BlockSpec((bt, n_states), lambda i: (i, 0)),        # x: tiled over batch
        pl.BlockSpec((n_states, hidden), lambda i: (0, 0)),    # w1: VMEM-resident
        pl.BlockSpec((1, hidden), lambda i: (0, 0)),           # b1: resident (f32)
        pl.BlockSpec((hidden, hidden), lambda i: (0, 0)),      # w2: resident
        pl.BlockSpec((1, hidden), lambda i: (0, 0)),           # b2: resident (f32)
        pl.BlockSpec((hidden, n_actions), lambda i: (0, 0)),   # w3: resident
        pl.BlockSpec((1, n_actions), lambda i: (0, 0)),        # b3: resident (f32)
    ]
    out_specs = pl.BlockSpec((bt, n_actions), lambda i: (i, 0))

    w_item = jnp.dtype(w1.dtype).itemsize
    x_item = jnp.dtype(x.dtype).itemsize
    weight_elems = n_states * hidden + hidden * hidden + hidden * n_actions
    cost = pl.CostEstimate(
        flops=2 * b_total * weight_elems,
        transcendentals=0,
        bytes_accessed=(
            b_total * n_states * x_item        # x read
            + b_total * n_actions * 4          # out write (f32, narrow)
            + weight_elems * w_item            # weights read once
            + (2 * hidden + n_actions) * 4     # biases (f32)
        ),
    )

    out = pl.pallas_call(
        dqn_kernel,
        out_shape=jax.ShapeDtypeStruct((b_total, n_actions), jnp.float32),
        grid=grid,
        in_specs=in_specs,
        out_specs=out_specs,
        compiler_params=pltpu.CompilerParams(
            dimension_semantics=("parallel",),   # batch axis -> 2 TCs on v7x
        ),
        cost_estimate=cost,
    )(x, w1, b1, w2, b2, w3, b3)

    return out if b_total == B else out[:B]


def init_params(key, n_states, n_actions, hidden=128):
    """Deterministic synthetic init (uniform ~ PyTorch Linear default fan-in bound)."""
    ks = jax.random.split(key, 6)

    def lin(kw, kb, fan_in, fan_out):
        bound = 1.0 / jnp.sqrt(fan_in)
        w = jax.random.uniform(kw, (fan_in, fan_out), jnp.float32, -bound, bound)
        b = jax.random.uniform(kb, (1, fan_out), jnp.float32, -bound, bound)
        return w, b

    w1, b1 = lin(ks[0], ks[1], n_states, hidden)
    w2, b2 = lin(ks[2], ks[3], hidden, hidden)
    w3, b3 = lin(ks[4], ks[5], hidden, n_actions)
    return {"w1": w1, "b1": b1, "w2": w2, "b2": b2, "w3": w3, "b3": b3}


def dqn_reference(x, p):
    h1 = jnp.maximum(x @ p["w1"] + p["b1"], 0.0)
    h2 = jnp.maximum(h1 @ p["w2"] + p["b2"], 0.0)
    return h2 @ p["w3"] + p["b3"]


if __name__ == "__main__":
    key = jax.random.PRNGKey(0)
    k_param, k_x1, k_x2 = jax.random.split(key, 3)

    n_states, n_actions = 16, 4
    params = init_params(k_param, n_states, n_actions)

    # --- small batch (action selection), f32 path, tight tolerance ---
    B = 4
    x = jax.random.normal(k_x1, (B, n_states), jnp.float32)
    out = jax.block_until_ready(dqn_forward(x, params))
    ref = dqn_reference(x, params)
    assert out.shape == (B, n_actions)
    assert jnp.allclose(out, ref, atol=1e-4, rtol=1e-4)

    # --- larger, non-tile-multiple batch (exercises 2-step grid + ragged block) ---
    B2 = 300
    x2 = jax.random.normal(k_x2, (B2, n_states), jnp.float32)
    out2 = jax.block_until_ready(dqn_forward(x2, params))
    ref2 = dqn_reference(x2, params)
    assert out2.shape == (B2, n_actions)
    assert jnp.allclose(out2, ref2, atol=1e-4, rtol=1e-4)

    # --- bf16 weights (cast once outside the hot path), x stays f32, f32 accum ---
    params_bf16 = prepare_params(params, jnp.bfloat16)
    out3 = jax.block_until_ready(dqn_forward(x2, params_bf16))
    assert out3.shape == (B2, n_actions)
    assert bool(jnp.all(jnp.isfinite(out3)))
    assert jnp.allclose(out3, ref2, atol=1e-1, rtol=1e-1)

    print("KERNEL_OK")
</pallas_src>

<mosaic_0001>
module attributes {stable_mosaic.version = 11 : i64} {
  func.func @dqn_kernel(%arg0: i32, %arg1: memref<16x16xf32, #tpu.memory_space<vmem>>, %arg2: memref<16x128xf32, #tpu.memory_space<vmem>>, %arg3: memref<1x128xf32, #tpu.memory_space<vmem>>, %arg4: memref<128x128xf32, #tpu.memory_space<vmem>>, %arg5: memref<1x128xf32, #tpu.memory_space<vmem>>, %arg6: memref<128x4xf32, #tpu.memory_space<vmem>>, %arg7: memref<1x4xf32, #tpu.memory_space<vmem>>, %arg8: memref<16x4xf32, #tpu.memory_space<vmem>>) attributes {dimension_semantics = [#tpu.dimension_semantics<parallel>], iteration_bounds = array<i64: 1>, scalar_prefetch = 0 : i64, scratch_operands = 0 : i64, tpu.core_type = #tpu.core_type<tc>, window_params = [{transform_indices = @transform_0, window_bounds = array<i64: 16, 16>}, {pipeline_mode = #tpu.pipeline_mode<synchronous>, transform_indices = @transform_1, window_bounds = array<i64: 16, 128>}, {pipeline_mode = #tpu.pipeline_mode<synchronous>, transform_indices = @transform_2, window_bounds = array<i64: 1, 128>}, {pipeline_mode = #tpu.pipeline_mode<synchronous>, transform_indices = @transform_3, window_bounds = array<i64: 128, 128>}, {pipeline_mode = #tpu.pipeline_mode<synchronous>, transform_indices = @transform_4, window_bounds = array<i64: 1, 128>}, {pipeline_mode = #tpu.pipeline_mode<synchronous>, transform_indices = @transform_5, window_bounds = array<i64: 128, 4>}, {pipeline_mode = #tpu.pipeline_mode<synchronous>, transform_indices = @transform_6, window_bounds = array<i64: 1, 4>}, {transform_indices = @transform_7, window_bounds = array<i64: 16, 4>}]} {
    %c0 = arith.constant 0 : index
    %c0_0 = arith.constant 0 : index
    %0 = vector.load %arg1[%c0, %c0_0] : memref<16x16xf32, #tpu.memory_space<vmem>>, vector<16x16xf32>
    %c0_1 = arith.constant 0 : index
    %c0_2 = arith.constant 0 : index
    %1 = vector.load %arg2[%c0_1, %c0_2] : memref<16x128xf32, #tpu.memory_space<vmem>>, vector<16x128xf32>
    %cst = arith.constant dense<0.000000e+00> : vector<16x128xf32>
    %2 = tpu.matmul %0, %1, %cst {dimension_numbers = #tpu.dot_dimension_numbers<[1], [0], [0], [1], [0, 0, 1, 1], [], []>} : vector<16x16xf32>, vector<16x128xf32>, vector<16x128xf32> -> vector<16x128xf32>
    %c0_3 = arith.constant 0 : index
    %c0_4 = arith.constant 0 : index
    %3 = vector.load %arg3[%c0_3, %c0_4] : memref<1x128xf32, #tpu.memory_space<vmem>>, vector<1x128xf32>
    %4 = vector.broadcast %3 : vector<1x128xf32> to vector<16x128xf32>
    %5 = arith.addf %2, %4 : vector<16x128xf32>
    %cst_5 = arith.constant 0.000000e+00 : f32
    %6 = vector.broadcast %cst_5 : f32 to vector<16x128xf32>
    %7 = arith.maximumf %5, %6 : vector<16x128xf32>
    %c0_6 = arith.constant 0 : index
    %c0_7 = arith.constant 0 : index
    %8 = vector.load %arg4[%c0_6, %c0_7] : memref<128x128xf32, #tpu.memory_space<vmem>>, vector<128x128xf32>
    %cst_8 = arith.constant dense<0.000000e+00> : vector<16x128xf32>
    %9 = tpu.matmul %7, %8, %cst_8 {dimension_numbers = #tpu.dot_dimension_numbers<[1], [0], [0], [1], [0, 0, 1, 1], [], []>} : vector<16x128xf32>, vector<128x128xf32>, vector<16x128xf32> -> vector<16x128xf32>
    %c0_9 = arith.constant 0 : index
    %c0_10 = arith.constant 0 : index
    %10 = vector.load %arg5[%c0_9, %c0_10] : memref<1x128xf32, #tpu.memory_space<vmem>>, vector<1x128xf32>
    %11 = vector.broadcast %10 : vector<1x128xf32> to vector<16x128xf32>
    %12 = arith.addf %9, %11 : vector<16x128xf32>
    %cst_11 = arith.constant 0.000000e+00 : f32
    %13 = vector.broadcast %cst_11 : f32 to vector<16x128xf32>
    %14 = arith.maximumf %12, %13 : vector<16x128xf32>
    %c0_12 = arith.constant 0 : index
    %c0_13 = arith.constant 0 : index
    %15 = vector.load %arg6[%c0_12, %c0_13] : memref<128x4xf32, #tpu.memory_space<vmem>>, vector<128x4xf32>
    %cst_14 = arith.constant dense<0.000000e+00> : vector<16x4xf32>
    %16 = tpu.matmul %14, %15, %cst_14 {dimension_numbers = #tpu.dot_dimension_numbers<[1], [0], [0], [1], [0, 0, 1, 1], [], []>} : vector<16x128xf32>, vector<128x4xf32>, vector<16x4xf32> -> vector<16x4xf32>
    %c0_15 = arith.constant 0 : index
    %c0_16 = arith.constant 0 : index
    %17 = vector.load %arg7[%c0_15, %c0_16] : memref<1x4xf32, #tpu.memory_space<vmem>>, vector<1x4xf32>
    %18 = vector.broadcast %17 : vector<1x4xf32> to vector<16x4xf32>
    %19 = arith.addf %16, %18 : vector<16x4xf32>
    %c0_17 = arith.constant 0 : index
    %c0_18 = arith.constant 0 : index
    %20 = vector.load %arg8[%c0_17, %c0_18] : memref<16x4xf32, #tpu.memory_space<vmem>>, vector<16x4xf32>
    tpu.vector_store %arg8[%c0_17, %c0_18], %19 {strides = array<i32>} : memref<16x4xf32, #tpu.memory_space<vmem>>, vector<16x4xf32>,
    return
  }
  func.func @transform_0(%arg0: i32) -> (i32, i32) {
    %c0_i32 = arith.constant 0 : i32
    %c0_i32_0 = arith.constant 0 : i32
    return %arg0, %c0_i32 : i32, i32
  }
  func.func @transform_1(%arg0: i32) -> (i32, i32) {
    %c0_i32 = arith.constant 0 : i32
    %c0_i32_0 = arith.constant 0 : i32
    %c0_i32_1 = arith.constant 0 : i32
    return %c0_i32, %c0_i32_0 : i32, i32
  }
  func.func @transform_2(%arg0: i32) -> (i32, i32) {
    %c0_i32 = arith.constant 0 : i32
    %c0_i32_0 = arith.constant 0 : i32
    %c0_i32_1 = arith.constant 0 : i32
    return %c0_i32, %c0_i32_0 : i32, i32
  }
  func.func @transform_3(%arg0: i32) -> (i32, i32) {
    %c0_i32 = arith.constant 0 : i32
    %c0_i32_0 = arith.constant 0 : i32
    %c0_i32_1 = arith.constant 0 : i32
    return %c0_i32, %c0_i32_0 : i32, i32
  }
  func.func @transform_4(%arg0: i32) -> (i32, i32) {
    %c0_i32 = arith.constant 0 : i32
    %c0_i32_0 = arith.constant 0 : i32
    %c0_i32_1 = arith.constant 0 : i32
    return %c0_i32, %c0_i32_0 : i32, i32
  }
  func.func @transform_5(%arg0: i32) -> (i32, i32) {
    %c0_i32 = arith.constant 0 : i32
    %c0_i32_0 = arith.constant 0 : i32
    %c0_i32_1 = arith.constant 0 : i32
    return %c0_i32, %c0_i32_0 : i32, i32
  }
  func.func @transform_6(%arg0: i32) -> (i32, i32) {
    %c0_i32 = arith.constant 0 : i32
    %c0_i32_0 = arith.constant 0 : i32
    %c0_i32_1 = arith.constant 0 : i32
    return %c0_i32, %c0_i32_0 : i32, i32
  }
  func.func @transform_7(%arg0: i32) -> (i32, i32) {
    %c0_i32 = arith.constant 0 : i32
    %c0_i32_0 = arith.constant 0 : i32
    return %arg0, %c0_i32 : i32, i32
  }
}

</mosaic_0001>

<llo_original>
// kernel: dqn_forward.1
$region0: #{dqn_forward.1}
  #allocation0 [shape = 'u32[]', space=smem, size = 0x4, offset = 0x4, fixed_abs, tag = 'smem constant byte address 0x4 - core index']
  #allocation1 [shape = 'u32[144,128]{1,0:T(1,128)}', space=vmem, size = 0x12000, scoped, tag = 'internal scratch']
  %s0 = inlined_call_operand.vmem [shape: f32[16,16], index: 0, kind: input, shape index: {}]
  %s1 = inlined_call_operand.vmem [shape: f32[16,128], index: 1, kind: input, shape index: {}]
  %s2 = inlined_call_operand.vmem [shape: f32[1,128], index: 2, kind: input, shape index: {}]
  %s3 = inlined_call_operand.vmem [shape: f32[128,128], index: 3, kind: input, shape index: {}]
  %s4 = inlined_call_operand.vmem [shape: f32[1,128], index: 4, kind: input, shape index: {}]
  %s5 = inlined_call_operand.vmem [shape: f32[128,4], index: 5, kind: input, shape index: {}]
  %s6 = inlined_call_operand.vmem [shape: f32[1,4], index: 6, kind: input, shape index: {}]
  %s7 = inlined_call_operand.vmem [shape: f32[16,4], index: 7, kind: output, shape index: {}]
  %s8 = sld [smem:[#allocation0]]
  $region38: #{dqn_forward.1} parent=0
    _
  %s10 = ssub.s32 1, %s8
  %s11 = scalar_select 0, %s10, %s8
  // Predicated region
  $region2: #{dqn_forward.1} parent=0 // pred_check
    _
  $region3: #{dqn_forward.1} parent=0 // pred_check_branch
    %13 = sbr.rel (0) target = $region5
  $region4: #{dqn_forward.1} parent=0 // pred_region
    _
  $region5: #{dqn_forward.1} parent=0 // pred_fallthru
    _
  // Predicated region
  $region6: #{dqn_forward.1} parent=0 // pred_check
    _
  $region7: #{dqn_forward.1} parent=0 // pred_check_branch
    %15 = sbr.rel (0) target = $region9
  $region8: #{dqn_forward.1} parent=0 // pred_region
    _
  $region9: #{dqn_forward.1} parent=0 // pred_fallthru
    _
  // Predicated region
  $region10: #{dqn_forward.1} parent=0 // pred_check
    _
  $region11: #{dqn_forward.1} parent=0 // pred_check_branch
    %17 = sbr.rel (0) target = $region13
  $region12: #{dqn_forward.1} parent=0 // pred_region
    _
  $region13: #{dqn_forward.1} parent=0 // pred_fallthru
    _
  // Predicated region
  $region14: #{dqn_forward.1} parent=0 // pred_check
    _
  $region15: #{dqn_forward.1} parent=0 // pred_check_branch
    %19 = sbr.rel (0) target = $region17
  $region16: #{dqn_forward.1} parent=0 // pred_region
    _
  $region17: #{dqn_forward.1} parent=0 // pred_fallthru
    _
  // Predicated region
  $region18: #{dqn_forward.1} parent=0 // pred_check
    _
  $region19: #{dqn_forward.1} parent=0 // pred_check_branch
    %21 = sbr.rel (0) target = $region21
  $region20: #{dqn_forward.1} parent=0 // pred_region
    _
  $region21: #{dqn_forward.1} parent=0 // pred_fallthru
    _
  // Predicated region
  $region22: #{dqn_forward.1} parent=0 // pred_check
    _
  $region23: #{dqn_forward.1} parent=0 // pred_check_branch
    %23 = sbr.rel (0) target = $region25
  $region24: #{dqn_forward.1} parent=0 // pred_region
    _
  $region25: #{dqn_forward.1} parent=0 // pred_fallthru
    _
  // Predicated region
  $region26: #{dqn_forward.1} parent=0 // pred_check
    _
  $region27: #{dqn_forward.1} parent=0 // pred_check_branch
    %25 = sbr.rel (0) target = $region29
  $region28: #{dqn_forward.1} parent=0 // pred_region
    _
  $region29: #{dqn_forward.1} parent=0 // pred_fallthru
    _
  %v26 = vld [vmem:[%s0] sm:$0xff]
  %v27 = vld [vmem:[%s0 + $0x8] sm:$0xff]
  %v28 = vld [vmem:[%s1] sm:$0xff]
  %v29 = vld [vmem:[%s1 + $0x8] sm:$0xff]
  %v30 = vld [vmem:[%s2] sm:$0x1]
  %v32 = vlaneseq
  %v33 = vshrl.u32 %v32, 7
  %v34 = vsub.s32 0, %v33
  %v35 = vrot.slane %v30, %v34
  %vm37 = vcmask 130048
  %v39 = vsel %vm37, %v26, 0
  %v42 = vsel %vm37, %v27, 0
  %44 = vmatprep.subr.mxu0 0.0
  %45 = vmatpush1.msra.mxu0 %v28
  %46 = vmatprep.subr.mxu0 0.0
  %47 = vmatpush1.msra.mxu0 %v29
  %48 = vmatprep.subr.mxu0 0.0
  %49 = vmatpush1.msra.mxu0 0.0
  %50 = vmatprep.subr.mxu0 0.0
  %51 = vmatpush1.msra.mxu0 0.0
  %52 = vmatprep.subr.mxu0 0.0
  %53 = vmatpush1.msra.mxu0 0.0
  %54 = vmatprep.subr.mxu0 0.0
  %55 = vmatpush1.msra.mxu0 0.0
  %56 = vmatprep.subr.mxu0 0.0
  %57 = vmatpush1.msra.mxu0 0.0
  %58 = vmatprep.subr.mxu0 0.0
  %59 = vmatpush1.msra.mxu0 0.0
  %60 = vmatprep.subr.mxu0 0.0
  %61 = vmatpush1.msra.mxu0 0.0
  %62 = vmatprep.subr.mxu0 0.0
  %63 = vmatpush1.msra.mxu0 0.0
  %64 = vmatprep.subr.mxu0 0.0
  %65 = vmatpush1.msra.mxu0 0.0
  %66 = vmatprep.subr.mxu0 0.0
  %67 = vmatpush1.msra.mxu0 0.0
  %68 = vmatprep.subr.mxu0 0.0
  %69 = vmatpush1.msra.mxu0 0.0
  %70 = vmatprep.subr.mxu0 0.0
  %71 = vmatpush1.msra.mxu0 0.0
  %72 = vmatprep.subr.mxu0 0.0
  %73 = vmatpush1.msra.mxu0 0.0
  %74 = vmatprep.subr.mxu0 0.0
  %75 = vmatpush1.msra.mxu0 0.0
  %76 = vmatprep.subr.mxu0 0.0
  %77 = vmatpush1.msra.mxu0 0.0
  %78 = vmatprep.subr.mxu0 0.0
  %79 = vmatpush1.msra.mxu0 0.0
  %80 = vmatprep.subr.mxu0 0.0
  %81 = vmatpush1.msra.mxu0 0.0
  %82 = vmatprep.subr.mxu0 0.0
  %83 = vmatpush1.msra.mxu0 0.0
  %84 = vmatprep.subr.mxu0 0.0
  %85 = vmatpush1.msra.mxu0 0.0
  %86 = vmatprep.subr.mxu0 0.0
  %87 = vmatpush1.msra.mxu0 0.0
  %88 = vmatprep.subr.mxu0 0.0
  %89 = vmatpush1.msra.mxu0 0.0
  %90 = vmatprep.subr.mxu0 0.0
  %91 = vmatpush1.msra.mxu0 0.0
  %92 = vmatprep.subr.mxu0 0.0
  %93 = vmatpush1.msra.mxu0 0.0
  %94 = vmatprep.subr.mxu0 0.0
  %95 = vmatpush1.msra.mxu0 0.0
  %96 = vmatprep.subr.mxu0 0.0
  %97 = vmatpush1.msra.mxu0 0.0
  %98 = vmatprep.subr.mxu0 0.0
  %99 = vmatpush1.msra.mxu0 0.0
  %100 = vmatprep.subr.mxu0 0.0
  %101 = vmatpush1.msra.mxu0 0.0
  %102 = vmatprep.subr.mxu0 0.0
  %103 = vmatpush1.msra.mxu0 0.0
  %104 = vmatprep.subr.mxu0 0.0
  %105 = vmatpush1.msra.mxu0 0.0
  %106 = vmatprep.subr.mxu0 0.0
  %107 = vmatpush1.msra.mxu0 0.0
  %108 = vmatprep.mubr.f32.mxu0 0.0
  %109 = vmatmul.mubr.f32.gmra.mrb[0].mxu0 %v39
  %v110 = vpop.f32.mrb[0].mxu0
  %v111 = vadd.f32 %v35, %v110
  %v112 = vpop.f32.mrb[0].mxu0
  %113 = vmatprep.mubr.f32.mxu0 0.0
  %114 = vmatmul.mubr.f32.gmra.mrb[0].mxu0 %v42
  %v115 = vpop.f32.mrb[0].mxu0
  %v116 = vadd.f32 %v35, %v115
  %v117 = vpop.f32.mrb[0].mxu0
  %118 = vdwg.mxu0
  %v119 = vmax.f32 %v111, 0.0
  %v120 = vmax.f32 %v116, 0.0
  %v121 = vld [vmem:[%s3] sm:$0xff]
  %v122 = vld [vmem:[%s3 + $0x8] sm:$0xff]
  %v123 = vld [vmem:[%s3 + $0x10] sm:$0xff]
  %v124 = vld [vmem:[%s3 + $0x18] sm:$0xff]
  %v125 = vld [vmem:[%s3 + $0x20] sm:$0xff]
  %v126 = vld [vmem:[%s3 + $0x28] sm:$0xff]
  %v127 = vld [vmem:[%s3 + $0x30] sm:$0xff]
  %v128 = vld [vmem:[%s3 + $0x38] sm:$0xff]
  %v129 = vld [vmem:[%s3 + $0x40] sm:$0xff]
  %v130 = vld [vmem:[%s3 + $0x48] sm:$0xff]
  %v131 = vld [vmem:[%s3 + $0x50] sm:$0xff]
  %v132 = vld [vmem:[%s3 + $0x58] sm:$0xff]
  %v133 = vld [vmem:[%s3 + $0x60] sm:$0xff]
  %v134 = vld [vmem:[%s3 + $0x68] sm:$0xff]
  %v135 = vld [vmem:[%s3 + $0x70] sm:$0xff]
  %v136 = vld [vmem:[%s3 + $0x78] sm:$0xff]
  %v137 = vld [vmem:[%s4] sm:$0x1]
  %v139 = vlaneseq
  %v140 = vshrl.u32 %v139, 7
  %v141 = vsub.s32 0, %v140
  %v142 = vrot.slane %v137, %v141
  %144 = vmatprep.subr.mxu0 0.0
  %145 = vmatpush1.msra.mxu0 %v121
  %146 = vmatprep.subr.mxu0 0.0
  %147 = vmatpush1.msra.mxu0 %v122
  %148 = vmatprep.subr.mxu0 0.0
  %149 = vmatpush1.msra.mxu0 %v123
  %150 = vmatprep.subr.mxu0 0.0
  %151 = vmatpush1.msra.mxu0 %v124
  %152 = vmatprep.subr.mxu0 0.0
  %153 = vmatpush1.msra.mxu0 %v125
  %154 = vmatprep.subr.mxu0 0.0
  %155 = vmatpush1.msra.mxu0 %v126
  %156 = vmatprep.subr.mxu0 0.0
  %157 = vmatpush1.msra.mxu0 %v127
  %158 = vmatprep.subr.mxu0 0.0
  %159 = vmatpush1.msra.mxu0 %v128
  %160 = vmatprep.subr.mxu0 0.0
  %161 = vmatpush1.msra.mxu0 %v129
  %162 = vmatprep.subr.mxu0 0.0
  %163 = vmatpush1.msra.mxu0 %v130
  %164 = vmatprep.subr.mxu0 0.0
  %165 = vmatpush1.msra.mxu0 %v131
  %166 = vmatprep.subr.mxu0 0.0
  %167 = vmatpush1.msra.mxu0 %v132
  %168 = vmatprep.subr.mxu0 0.0
  %169 = vmatpush1.msra.mxu0 %v133
  %170 = vmatprep.subr.mxu0 0.0
  %171 = vmatpush1.msra.mxu0 %v134
  %172 = vmatprep.subr.mxu0 0.0
  %173 = vmatpush1.msra.mxu0 %v135
  %174 = vmatprep.subr.mxu0 0.0
  %175 = vmatpush1.msra.mxu0 %v136
  %176 = vmatprep.subr.mxu0 0.0
  %177 = vmatpush1.msra.mxu0 0.0
  %178 = vmatprep.subr.mxu0 0.0
  %179 = vmatpush1.msra.mxu0 0.0
  %180 = vmatprep.subr.mxu0 0.0
  %181 = vmatpush1.msra.mxu0 0.0
  %182 = vmatprep.subr.mxu0 0.0
  %183 = vmatpush1.msra.mxu0 0.0
  %184 = vmatprep.subr.mxu0 0.0
  %185 = vmatpush1.msra.mxu0 0.0
  %186 = vmatprep.subr.mxu0 0.0
  %187 = vmatpush1.msra.mxu0 0.0
  %188 = vmatprep.subr.mxu0 0.0
  %189 = vmatpush1.msra.mxu0 0.0
  %190 = vmatprep.subr.mxu0 0.0
  %191 = vmatpush1.msra.mxu0 0.0
  %192 = vmatprep.subr.mxu0 0.0
  %193 = vmatpush1.msra.mxu0 0.0
  %194 = vmatprep.subr.mxu0 0.0
  %195 = vmatpush1.msra.mxu0 0.0
  %196 = vmatprep.subr.mxu0 0.0
  %197 = vmatpush1.msra.mxu0 0.0
  %198 = vmatprep.subr.mxu0 0.0
  %199 = vmatpush1.msra.mxu0 0.0
  %200 = vmatprep.subr.mxu0 0.0
  %201 = vmatpush1.msra.mxu0 0.0
  %202 = vmatprep.subr.mxu0 0.0
  %203 = vmatpush1.msra.mxu0 0.0
  %204 = vmatprep.subr.mxu0 0.0
  %205 = vmatpush1.msra.mxu0 0.0
  %206 = vmatprep.subr.mxu0 0.0
  %207 = vmatpush1.msra.mxu0 0.0
  %208 = vmatprep.mubr.f32.mxu0 0.0
  %209 = vmatmul.mubr.f32.gmra.mrb[0].mxu0 %v119
  %v210 = vpop.f32.mrb[0].mxu0
  %v211 = vadd.f32 %v142, %v210
  %v212 = vpop.f32.mrb[0].mxu0
  %213 = vmatprep.mubr.f32.mxu0 0.0
  %214 = vmatmul.mubr.f32.gmra.mrb[0].mxu0 %v120
  %v215 = vpop.f32.mrb[0].mxu0
  %v216 = vadd.f32 %v142, %v215
  %v217 = vpop.f32.mrb[0].mxu0
  %218 = vdwg.mxu0
  %v219 = vmax.f32 %v211, 0.0
  %v220 = vmax.f32 %v216, 0.0
  %v221 = vld [vmem:[%s5] sm:$0xff]
  %v222 = vld [vmem:[%s5 + $0x8] sm:$0xff]
  %v223 = vld [vmem:[%s5 + $0x10] sm:$0xff]
  %v224 = vld [vmem:[%s5 + $0x18] sm:$0xff]
  %v225 = vld [vmem:[%s5 + $0x20] sm:$0xff]
  %v226 = vld [vmem:[%s5 + $0x28] sm:$0xff]
  %v227 = vld [vmem:[%s5 + $0x30] sm:$0xff]
  %v228 = vld [vmem:[%s5 + $0x38] sm:$0xff]
  %v229 = vld [vmem:[%s5 + $0x40] sm:$0xff]
  %v230 = vld [vmem:[%s5 + $0x48] sm:$0xff]
  %v231 = vld [vmem:[%s5 + $0x50] sm:$0xff]
  %v232 = vld [vmem:[%s5 + $0x58] sm:$0xff]
  %v233 = vld [vmem:[%s5 + $0x60] sm:$0xff]
  %v234 = vld [vmem:[%s5 + $0x68] sm:$0xff]
  %v235 = vld [vmem:[%s5 + $0x70] sm:$0xff]
  %v236 = vld [vmem:[%s5 + $0x78] sm:$0xff]
  %v237 = vld [vmem:[%s6] sm:$0x1]
  %v239 = vlaneseq
  %v240 = vshrl.u32 %v239, 7
  %v241 = vsub.s32 0, %v240
  %v242 = vrot.slane %v237, %v241
  %244 = vmatprep.subr.mxu0 0.0
  %245 = vmatpush1.msra.mxu0 %v221
  %246 = vmatprep.subr.mxu0 0.0
  %247 = vmatpush1.msra.mxu0 %v222
  %248 = vmatprep.subr.mxu0 0.0
  %249 = vmatpush1.msra.mxu0 %v223
  %250 = vmatprep.subr.mxu0 0.0
  %251 = vmatpush1.msra.mxu0 %v224
  %252 = vmatprep.subr.mxu0 0.0
  %253 = vmatpush1.msra.mxu0 %v225
  %254 = vmatprep.subr.mxu0 0.0
  %255 = vmatpush1.msra.mxu0 %v226
  %256 = vmatprep.subr.mxu0 0.0
  %257 = vmatpush1.msra.mxu0 %v227
  %258 = vmatprep.subr.mxu0 0.0
  %259 = vmatpush1.msra.mxu0 %v228
  %260 = vmatprep.subr.mxu0 0.0
  %261 = vmatpush1.msra.mxu0 %v229
  %262 = vmatprep.subr.mxu0 0.0
  %263 = vmatpush1.msra.mxu0 %v230
  %264 = vmatprep.subr.mxu0 0.0
  %265 = vmatpush1.msra.mxu0 %v231
  %266 = vmatprep.subr.mxu0 0.0
  %267 = vmatpush1.msra.mxu0 %v232
  %268 = vmatprep.subr.mxu0 0.0
  %269 = vmatpush1.msra.mxu0 %v233
  %270 = vmatprep.subr.mxu0 0.0
  %271 = vmatpush1.msra.mxu0 %v234
  %272 = vmatprep.subr.mxu0 0.0
  %273 = vmatpush1.msra.mxu0 %v235
  %274 = vmatprep.subr.mxu0 0.0
  %275 = vmatpush1.msra.mxu0 %v236
  %276 = vmatprep.subr.mxu0 0.0
  %277 = vmatpush1.msra.mxu0 0.0
  %278 = vmatprep.subr.mxu0 0.0
  %279 = vmatpush1.msra.mxu0 0.0
  %280 = vmatprep.subr.mxu0 0.0
  %281 = vmatpush1.msra.mxu0 0.0
  %282 = vmatprep.subr.mxu0 0.0
  %283 = vmatpush1.msra.mxu0 0.0
  %284 = vmatprep.subr.mxu0 0.0
  %285 = vmatpush1.msra.mxu0 0.0
  %286 = vmatprep.subr.mxu0 0.0
  %287 = vmatpush1.msra.mxu0 0.0
  %288 = vmatprep.subr.mxu0 0.0
  %289 = vmatpush1.msra.mxu0 0.0
  %290 = vmatprep.subr.mxu0 0.0
  %291 = vmatpush1.msra.mxu0 0.0
  %292 = vmatprep.subr.mxu0 0.0
  %293 = vmatpush1.msra.mxu0 0.0
  %294 = vmatprep.subr.mxu0 0.0
  %295 = vmatpush1.msra.mxu0 0.0
  %296 = vmatprep.subr.mxu0 0.0
  %297 = vmatpush1.msra.mxu0 0.0
  %298 = vmatprep.subr.mxu0 0.0
  %299 = vmatpush1.msra.mxu0 0.0
  %300 = vmatprep.subr.mxu0 0.0
  %301 = vmatpush1.msra.mxu0 0.0
  %302 = vmatprep.subr.mxu0 0.0
  %303 = vmatpush1.msra.mxu0 0.0
  %304 = vmatprep.subr.mxu0 0.0
  %305 = vmatpush1.msra.mxu0 0.0
  %306 = vmatprep.subr.mxu0 0.0
  %307 = vmatpush1.msra.mxu0 0.0
  %308 = vmatprep.mubr.f32.mxu0 0.0
  %309 = vmatmul.mubr.f32.gmra.mrb[0].mxu0 %v219
  %v310 = vpop.f32.mrb[0].mxu0
  %v311 = vadd.f32 %v242, %v310
  %v312 = vpop.f32.mrb[0].mxu0
  %313 = vmatprep.mubr.f32.mxu0 0.0
  %314 = vmatmul.mubr.f32.gmra.mrb[0].mxu0 %v220
  %v315 = vpop.f32.mrb[0].mxu0
  %v316 = vadd.f32 %v242, %v315
  %v317 = vpop.f32.mrb[0].mxu0
  %318 = vdwg.mxu0
  %vm319 = vcmask 31744
  %320 = vst.msk [vmem:[%s7] sm:$0xff] %vm319, %v311
  %321 = vst.msk [vmem:[%s7 + $0x8] sm:$0xff] %vm319, %v316
  // Predicated region
  $region30: #{dqn_forward.1} parent=0 // pred_check
    _
  $region31: #{dqn_forward.1} parent=0 // pred_check_branch
    %323 = sbr.rel (0) target = $region33
  $region32: #{dqn_forward.1} parent=0 // pred_region
    _
  $region33: #{dqn_forward.1} parent=0 // pred_fallthru
    _
  // Predicated region
  $region34: #{dqn_forward.1} parent=0 // pred_check
    _
  $region35: #{dqn_forward.1} parent=0 // pred_check_branch
    %325 = sbr.rel (0) target = $region37
  $region36: #{dqn_forward.1} parent=0 // pred_region
    _
  $region37: #{dqn_forward.1} parent=0 // pred_fallthru
    _

</llo_original>
